<compile_context>
chip_gen: v7x
topology: tpu7x:2x2x1
jax: 0.10.0
libtpu: 0.0.40
codegen_flags: <defaults>
</compile_context>

<pallas_src>
from functools import partial

import jax
import jax.numpy as jnp
from jax.experimental import pallas as pl
from jax.experimental.pallas import tpu as pltpu


def _fwd_dynamics_kernel(x_ref, a_ref, w1_ref, b1_ref, w2_ref, b2_ref, out_ref):
    """out = relu(x @ w1[:E] + a @ w1[E:] + b1) @ w2 + b2 for one batch tile.

    x_ref : (TB, E)        VMEM f32   (batch-tiled)
    a_ref : (TB, A)        VMEM f32   (batch-tiled)
    w1_ref: (E+A, 512)     VMEM, resident across batch tiles (param dtype)
    b1_ref: (1, 512)       VMEM f32, resident
    w2_ref: (512, E)       VMEM, resident (param dtype)
    b2_ref: (1, E)         VMEM f32, resident
    out_ref:(TB, E)        VMEM
    """
    e = x_ref.shape[-1]
    cdt = w1_ref.dtype  # MXU input dtype (bf16 fast path, or f32)

    # Split matmul replaces the concat. E is a multiple of 8, so both w1 slices
    # are sublane-aligned static views of the resident weight tile.
    h = jnp.dot(x_ref[...].astype(cdt), w1_ref[:e, :],
                preferred_element_type=jnp.float32)
    h = h + jnp.dot(a_ref[...].astype(cdt), w1_ref[e:, :],
                    preferred_element_type=jnp.float32)
    h = jnp.maximum(h + b1_ref[...], 0.0)

    o = jnp.dot(h.astype(cdt), w2_ref[...], preferred_element_type=jnp.float32)
    # TODO(synk): output lane width = embed_dim (32 < 128) -> masked vst on the
    # writeback; if the downstream intrinsic-reward consumer (squared error /
    # reduction) is available, fuse it here (or switch to the transposed
    # features-on-sublanes layout) to make the HBM write lane-dense.
    out_ref[...] = (o + b2_ref[...]).astype(out_ref.dtype)


def _round_up(n: int, m: int) -> int:
    return ((n + m - 1) // m) * m


def _pick_batch_tile(B: int, block_b: int) -> int:
    """Batch-tile policy: large tiles (amortize grid-step overhead), >= 2 grid
    steps when possible (v7x megacore), tile a multiple of 8 unless tile == B."""
    if B <= 8:
        return B
    if B <= 2 * block_b:
        return min(_round_up(pl.cdiv(B, 2), 8), block_b)
    return block_b


@partial(jax.jit, static_argnames=("block_b", "out_dtype"))
def forward_dynamics(x, a, w1, b1, w2, b2, block_b=2048, out_dtype=jnp.float32):
    """ForwardDynamics forward pass: relu([x|a] @ w1 + b1) @ w2 + b2.

    x: (B, E) f32, a: (B, A) f32.
    w1: (E+A, H), w2: (H, E) are used in the dtype they are passed in (cast to
    bf16 ONCE at init in the caller for the fast path); biases may be 1-D.
    """
    B, E = x.shape
    A = a.shape[1]
    d_in, H = w1.shape
    assert d_in == E + A and w2.shape == (H, E)
    assert b1.shape[-1] == H and b2.shape[-1] == E
    assert E % 8 == 0, "embed_dim must be sublane-aligned for the static w1 split"

    b1_2d = b1.reshape(1, H).astype(jnp.float32)
    b2_2d = b2.reshape(1, E).astype(jnp.float32)

    tb = _pick_batch_tile(B, block_b)
    grid = (pl.cdiv(B, tb),)

    w_bytes = jnp.dtype(w1.dtype).itemsize
    cost = pl.CostEstimate(
        flops=2 * B * (d_in * H + H * E),
        transcendentals=0,
        bytes_accessed=(B * (E + A) * 4                       # x, a in
                        + (d_in * H + H * E) * w_bytes        # weights
                        + (H + E) * 4                         # biases
                        + B * E * jnp.dtype(out_dtype).itemsize),  # output
    )

    return pl.pallas_call(
        _fwd_dynamics_kernel,
        out_shape=jax.ShapeDtypeStruct((B, E), out_dtype),
        grid=grid,
        in_specs=[
            pl.BlockSpec((tb, E), lambda i: (i, 0)),      # x   (batch-tiled)
            pl.BlockSpec((tb, A), lambda i: (i, 0)),      # a   (batch-tiled)
            pl.BlockSpec((d_in, H), lambda i: (0, 0)),    # w1  (resident)
            pl.BlockSpec((1, H), lambda i: (0, 0)),       # b1  (resident)
            pl.BlockSpec((H, E), lambda i: (0, 0)),       # w2  (resident)
            pl.BlockSpec((1, E), lambda i: (0, 0)),       # b2  (resident)
        ],
        out_specs=pl.BlockSpec((tb, E), lambda i: (i, 0)),
        compiler_params=pltpu.CompilerParams(
            # Independent batch tiles -> shard across TCs on v7x megacore.
            dimension_semantics=("parallel",),
        ),
        cost_estimate=cost,
    )(x, a, w1, b1_2d, w2, b2_2d)


def _reference(x, a, w1, b1, w2, b2, compute_dtype=jnp.float32):
    """Pure-JAX reference with the same compute-dtype casts as the kernel."""
    xa = jnp.concatenate([x, a], axis=-1)
    h = jnp.dot(xa.astype(compute_dtype), w1.astype(compute_dtype),
                preferred_element_type=jnp.float32)
    h = jnp.maximum(h + b1.reshape(1, -1).astype(jnp.float32), 0.0)
    o = jnp.dot(h.astype(compute_dtype), w2.astype(compute_dtype),
                preferred_element_type=jnp.float32)
    return o + b2.reshape(1, -1).astype(jnp.float32)


if __name__ == "__main__":
    # Shapes consistent with the module's forward: x (BS, embed), a (BS, action).
    BS, EMBED_DIM, ACTION_DIM, HIDDEN = 2, 32, 8, 512

    key = jax.random.PRNGKey(0)
    kx, ka, kw1, kb1, kw2, kb2 = jax.random.split(key, 6)

    x = jax.random.normal(kx, (BS, EMBED_DIM), dtype=jnp.float32)
    a = jax.random.normal(ka, (BS, ACTION_DIM), dtype=jnp.float32)

    d_in = EMBED_DIM + ACTION_DIM
    w1 = jax.random.normal(kw1, (d_in, HIDDEN), dtype=jnp.float32) * 0.05
    b1 = jax.random.normal(kb1, (HIDDEN,), dtype=jnp.float32) * 0.01
    w2 = jax.random.normal(kw2, (HIDDEN, EMBED_DIM), dtype=jnp.float32) * 0.05
    b2 = jax.random.normal(kb2, (EMBED_DIM,), dtype=jnp.float32) * 0.01

    # 1) f32 parameter path: exact check of the module semantics.
    out_f32 = jax.block_until_ready(forward_dynamics(x, a, w1, b1, w2, b2))
    ref_f32 = _reference(x, a, w1, b1, w2, b2, compute_dtype=jnp.float32)
    assert out_f32.shape == (BS, EMBED_DIM)
    assert jnp.allclose(out_f32, ref_f32, atol=1e-4, rtol=1e-4)

    # 2) bf16-weight fast path: weights cast ONCE here (init-time), not per call.
    w1_bf, w2_bf = w1.astype(jnp.bfloat16), w2.astype(jnp.bfloat16)
    out_bf16 = jax.block_until_ready(forward_dynamics(x, a, w1_bf, b1, w2_bf, b2))
    ref_bf16 = _reference(x, a, w1, b1, w2, b2, compute_dtype=jnp.bfloat16)
    assert out_bf16.shape == (BS, EMBED_DIM)
    assert jnp.allclose(out_bf16, ref_bf16, atol=5e-3, rtol=5e-3)
    assert jnp.allclose(out_bf16, ref_f32, atol=3e-2, rtol=3e-2)

    # 3) Multi-tile grid (>= 2 parallel steps, partial last tile) correctness.
    B_BIG = 300
    kx2, ka2 = jax.random.split(jax.random.PRNGKey(1), 2)
    x2 = jax.random.normal(kx2, (B_BIG, EMBED_DIM), dtype=jnp.float32)
    a2 = jax.random.normal(ka2, (B_BIG, ACTION_DIM), dtype=jnp.float32)
    out_big = jax.block_until_ready(forward_dynamics(x2, a2, w1, b1, w2, b2))
    ref_big = _reference(x2, a2, w1, b1, w2, b2, compute_dtype=jnp.float32)
    assert out_big.shape == (B_BIG, EMBED_DIM)
    assert jnp.allclose(out_big, ref_big, atol=1e-4, rtol=1e-4)

    print("KERNEL_OK")
</pallas_src>

<mosaic_0001>
module attributes {stable_mosaic.version = 11 : i64} {
  func.func @_fwd_dynamics_kernel(%arg0: i32, %arg1: memref<2x32xf32, #tpu.memory_space<vmem>>, %arg2: memref<2x8xf32, #tpu.memory_space<vmem>>, %arg3: memref<40x512xf32, #tpu.memory_space<vmem>>, %arg4: memref<1x512xf32, #tpu.memory_space<vmem>>, %arg5: memref<512x32xf32, #tpu.memory_space<vmem>>, %arg6: memref<1x32xf32, #tpu.memory_space<vmem>>, %arg7: memref<2x32xf32, #tpu.memory_space<vmem>>) attributes {dimension_semantics = [#tpu.dimension_semantics<parallel>], iteration_bounds = array<i64: 1>, scalar_prefetch = 0 : i64, scratch_operands = 0 : i64, tpu.core_type = #tpu.core_type<tc>, window_params = [{transform_indices = @transform_0, window_bounds = array<i64: 2, 32>}, {transform_indices = @transform_1, window_bounds = array<i64: 2, 8>}, {pipeline_mode = #tpu.pipeline_mode<synchronous>, transform_indices = @transform_2, window_bounds = array<i64: 40, 512>}, {pipeline_mode = #tpu.pipeline_mode<synchronous>, transform_indices = @transform_3, window_bounds = array<i64: 1, 512>}, {pipeline_mode = #tpu.pipeline_mode<synchronous>, transform_indices = @transform_4, window_bounds = array<i64: 512, 32>}, {pipeline_mode = #tpu.pipeline_mode<synchronous>, transform_indices = @transform_5, window_bounds = array<i64: 1, 32>}, {transform_indices = @transform_6, window_bounds = array<i64: 2, 32>}]} {
    %c0 = arith.constant 0 : index
    %c0_0 = arith.constant 0 : index
    %0 = vector.load %arg1[%c0, %c0_0] : memref<2x32xf32, #tpu.memory_space<vmem>>, vector<2x32xf32>
    %c0_1 = arith.constant 0 : index
    %c0_2 = arith.constant 0 : index
    %1 = vector.load %arg3[%c0_1, %c0_2] : memref<40x512xf32, #tpu.memory_space<vmem>>, vector<32x512xf32>
    %cst = arith.constant dense<0.000000e+00> : vector<2x512xf32>
    %2 = tpu.matmul %0, %1, %cst {dimension_numbers = #tpu.dot_dimension_numbers<[1], [0], [0], [1], [0, 0, 1, 1], [], []>} : vector<2x32xf32>, vector<32x512xf32>, vector<2x512xf32> -> vector<2x512xf32>
    %c0_3 = arith.constant 0 : index
    %c0_4 = arith.constant 0 : index
    %3 = vector.load %arg2[%c0_3, %c0_4] : memref<2x8xf32, #tpu.memory_space<vmem>>, vector<2x8xf32>
    %c32 = arith.constant 32 : index
    %c0_5 = arith.constant 0 : index
    %4 = vector.load %arg3[%c32, %c0_5] : memref<40x512xf32, #tpu.memory_space<vmem>>, vector<8x512xf32>
    %cst_6 = arith.constant dense<0.000000e+00> : vector<2x512xf32>
    %5 = tpu.matmul %3, %4, %cst_6 {dimension_numbers = #tpu.dot_dimension_numbers<[1], [0], [0], [1], [0, 0, 1, 1], [], []>} : vector<2x8xf32>, vector<8x512xf32>, vector<2x512xf32> -> vector<2x512xf32>
    %6 = arith.addf %2, %5 : vector<2x512xf32>
    %c0_7 = arith.constant 0 : index
    %c0_8 = arith.constant 0 : index
    %7 = vector.load %arg4[%c0_7, %c0_8] : memref<1x512xf32, #tpu.memory_space<vmem>>, vector<1x512xf32>
    %8 = vector.broadcast %7 : vector<1x512xf32> to vector<2x512xf32>
    %9 = arith.addf %6, %8 : vector<2x512xf32>
    %cst_9 = arith.constant 0.000000e+00 : f32
    %10 = vector.broadcast %cst_9 : f32 to vector<2x512xf32>
    %11 = arith.maximumf %9, %10 : vector<2x512xf32>
    %c0_10 = arith.constant 0 : index
    %c0_11 = arith.constant 0 : index
    %12 = vector.load %arg5[%c0_10, %c0_11] : memref<512x32xf32, #tpu.memory_space<vmem>>, vector<512x32xf32>
    %cst_12 = arith.constant dense<0.000000e+00> : vector<2x32xf32>
    %13 = tpu.matmul %11, %12, %cst_12 {dimension_numbers = #tpu.dot_dimension_numbers<[1], [0], [0], [1], [0, 0, 1, 1], [], []>} : vector<2x512xf32>, vector<512x32xf32>, vector<2x32xf32> -> vector<2x32xf32>
    %c0_13 = arith.constant 0 : index
    %c0_14 = arith.constant 0 : index
    %14 = vector.load %arg6[%c0_13, %c0_14] : memref<1x32xf32, #tpu.memory_space<vmem>>, vector<1x32xf32>
    %15 = vector.broadcast %14 : vector<1x32xf32> to vector<2x32xf32>
    %16 = arith.addf %13, %15 : vector<2x32xf32>
    %c0_15 = arith.constant 0 : index
    %c0_16 = arith.constant 0 : index
    %17 = vector.load %arg7[%c0_15, %c0_16] : memref<2x32xf32, #tpu.memory_space<vmem>>, vector<2x32xf32>
    tpu.vector_store %arg7[%c0_15, %c0_16], %16 {strides = array<i32>} : memref<2x32xf32, #tpu.memory_space<vmem>>, vector<2x32xf32>,
    return
  }
  func.func @transform_0(%arg0: i32) -> (i32, i32) {
    %c0_i32 = arith.constant 0 : i32
    %c0_i32_0 = arith.constant 0 : i32
    return %arg0, %c0_i32 : i32, i32
  }
  func.func @transform_1(%arg0: i32) -> (i32, i32) {
    %c0_i32 = arith.constant 0 : i32
    %c0_i32_0 = arith.constant 0 : i32
    return %arg0, %c0_i32 : i32, i32
  }
  func.func @transform_2(%arg0: i32) -> (i32, i32) {
    %c0_i32 = arith.constant 0 : i32
    %c0_i32_0 = arith.constant 0 : i32
    %c0_i32_1 = arith.constant 0 : i32
    return %c0_i32, %c0_i32_0 : i32, i32
  }
  func.func @transform_3(%arg0: i32) -> (i32, i32) {
    %c0_i32 = arith.constant 0 : i32
    %c0_i32_0 = arith.constant 0 : i32
    %c0_i32_1 = arith.constant 0 : i32
    return %c0_i32, %c0_i32_0 : i32, i32
  }
  func.func @transform_4(%arg0: i32) -> (i32, i32) {
    %c0_i32 = arith.constant 0 : i32
    %c0_i32_0 = arith.constant 0 : i32
    %c0_i32_1 = arith.constant 0 : i32
    return %c0_i32, %c0_i32_0 : i32, i32
  }
  func.func @transform_5(%arg0: i32) -> (i32, i32) {
    %c0_i32 = arith.constant 0 : i32
    %c0_i32_0 = arith.constant 0 : i32
    %c0_i32_1 = arith.constant 0 : i32
    return %c0_i32, %c0_i32_0 : i32, i32
  }
  func.func @transform_6(%arg0: i32) -> (i32, i32) {
    %c0_i32 = arith.constant 0 : i32
    %c0_i32_0 = arith.constant 0 : i32
    return %arg0, %c0_i32 : i32, i32
  }
}

</mosaic_0001>

<llo_original>
// kernel: forward_dynamics.1
$region0: #{forward_dynamics.1}
  #allocation0 [shape = 'u32[]', space=smem, size = 0x4, offset = 0x4, fixed_abs, tag = 'smem constant byte address 0x4 - core index']
  #allocation1 [shape = 'u32[144,128]{1,0:T(1,128)}', space=vmem, size = 0x12000, scoped, tag = 'internal scratch']
  %s0 = inlined_call_operand.vmem [shape: f32[2,32], index: 0, kind: input, shape index: {}]
  %s1 = inlined_call_operand.vmem [shape: f32[2,8], index: 1, kind: input, shape index: {}]
  %s2 = inlined_call_operand.vmem [shape: f32[40,512], index: 2, kind: input, shape index: {}]
  %s3 = inlined_call_operand.vmem [shape: f32[1,512], index: 3, kind: input, shape index: {}]
  %s4 = inlined_call_operand.vmem [shape: f32[512,32], index: 4, kind: input, shape index: {}]
  %s5 = inlined_call_operand.vmem [shape: f32[1,32], index: 5, kind: input, shape index: {}]
  %s6 = inlined_call_operand.hbm [shape: f32[2,32], index: 6, kind: output, shape index: {}]
  %s7 = sld [smem:[#allocation0]]
  $region34: #{forward_dynamics.1} parent=0
    _
  %s9 = ssub.s32 1, %s7
  %s10 = scalar_select 0, %s9, %s7
  $region1: #{forward_dynamics.1} parent=0
    #allocation2 [shape = 'u8[1024]{0}', space=vmem, size = 0x400, scoped, tag = 'output window, operand 0, single buffered']
    #allocation3 [shape = 's32[1]{0}', space=sflag, size = 0x4, scoped, tag = 'scoped memory for forward_dynamics.1']
    %11 = vsyncpa [#allocation3], 0
    // Predicated region
    $region2: #{forward_dynamics.1} parent=1 // pred_check
      _
    $region3: #{forward_dynamics.1} parent=1 // pred_check_branch
      %13 = sbr.rel (0) target = $region5
    $region4: #{forward_dynamics.1} parent=1 // pred_region
      _
    $region5: #{forward_dynamics.1} parent=1 // pred_fallthru
      _
    // Predicated region
    $region6: #{forward_dynamics.1} parent=1 // pred_check
      _
    $region7: #{forward_dynamics.1} parent=1 // pred_check_branch
      %15 = sbr.rel (0) target = $region9
    $region8: #{forward_dynamics.1} parent=1 // pred_region
      _
    $region9: #{forward_dynamics.1} parent=1 // pred_fallthru
      _
    // Predicated region
    $region10: #{forward_dynamics.1} parent=1 // pred_check
      _
    $region11: #{forward_dynamics.1} parent=1 // pred_check_branch
      %17 = sbr.rel (0) target = $region13
    $region12: #{forward_dynamics.1} parent=1 // pred_region
      _
    $region13: #{forward_dynamics.1} parent=1 // pred_fallthru
      _
    // Predicated region
    $region14: #{forward_dynamics.1} parent=1 // pred_check
      _
    $region15: #{forward_dynamics.1} parent=1 // pred_check_branch
      %19 = sbr.rel (0) target = $region17
    $region16: #{forward_dynamics.1} parent=1 // pred_region
      _
    $region17: #{forward_dynamics.1} parent=1 // pred_fallthru
      _
    // Predicated region
    $region18: #{forward_dynamics.1} parent=1 // pred_check
      _
    $region19: #{forward_dynamics.1} parent=1 // pred_check_branch
      %21 = sbr.rel (0) target = $region21
    $region20: #{forward_dynamics.1} parent=1 // pred_region
      _
    $region21: #{forward_dynamics.1} parent=1 // pred_fallthru
      _
    // Predicated region
    $region22: #{forward_dynamics.1} parent=1 // pred_check
      _
    $region23: #{forward_dynamics.1} parent=1 // pred_check_branch
      %23 = sbr.rel (0) target = $region25
    $region24: #{forward_dynamics.1} parent=1 // pred_region
      _
    $region25: #{forward_dynamics.1} parent=1 // pred_fallthru
      _
    %v24 = vld [vmem:[%s0] sm:$0x3]
    %v25 = vld [vmem:[%s2] sm:$0xff]
    %v26 = vld [vmem:[%s2 + $0x8] sm:$0xff]
    %v27 = vld [vmem:[%s2 + $0x10] sm:$0xff]
    %v28 = vld [vmem:[%s2 + $0x18] sm:$0xff]
    %v29 = vld [vmem:[%s2 + $0x20] sm:$0xff]
    %v30 = vld [vmem:[%s2 + $0x28] sm:$0xff]
    %v31 = vld [vmem:[%s2 + $0x30] sm:$0xff]
    %v32 = vld [vmem:[%s2 + $0x38] sm:$0xff]
    %v33 = vld [vmem:[%s2 + $0x40] sm:$0xff]
    %v34 = vld [vmem:[%s2 + $0x48] sm:$0xff]
    %v35 = vld [vmem:[%s2 + $0x50] sm:$0xff]
    %v36 = vld [vmem:[%s2 + $0x58] sm:$0xff]
    %v37 = vld [vmem:[%s2 + $0x60] sm:$0xff]
    %v38 = vld [vmem:[%s2 + $0x68] sm:$0xff]
    %v39 = vld [vmem:[%s2 + $0x70] sm:$0xff]
    %v40 = vld [vmem:[%s2 + $0x78] sm:$0xff]
    %v41 = vld [vmem:[%s1] sm:$0x3]
    %v42 = vld [vmem:[%s2 + $0x80] sm:$0xff]
    %v43 = vld [vmem:[%s2 + $0x88] sm:$0xff]
    %v44 = vld [vmem:[%s2 + $0x90] sm:$0xff]
    %v45 = vld [vmem:[%s2 + $0x98] sm:$0xff]
    %vm46 = vcmask 64512
    %v48 = vsel %vm46, %v41, 0
    %50 = vmatprep.subr.mxu0 %v43
    %51 = vmatpush1.msra.mxu0 %v42
    %52 = vmatprep.subr.mxu0 0.0
    %53 = vmatpush1.msra.mxu0 0.0
    %54 = vmatprep.subr.mxu0 0.0
    %55 = vmatpush1.msra.mxu0 0.0
    %56 = vmatprep.subr.mxu0 0.0
    %57 = vmatpush1.msra.mxu0 0.0
    %58 = vmatprep.subr.mxu0 0.0
    %59 = vmatpush1.msra.mxu0 0.0
    %60 = vmatprep.subr.mxu0 0.0
    %61 = vmatpush1.msra.mxu0 0.0
    %62 = vmatprep.subr.mxu0 0.0
    %63 = vmatpush1.msra.mxu0 0.0
    %64 = vmatprep.subr.mxu0 0.0
    %65 = vmatpush1.msra.mxu0 0.0
    %66 = vmatprep.subr.mxu0 0.0
    %67 = vmatpush1.msra.mxu0 0.0
    %68 = vmatprep.subr.mxu0 0.0
    %69 = vmatpush1.msra.mxu0 0.0
    %70 = vmatprep.subr.mxu0 0.0
    %71 = vmatpush1.msra.mxu0 0.0
    %72 = vmatprep.subr.mxu0 0.0
    %73 = vmatpush1.msra.mxu0 0.0
    %74 = vmatprep.subr.mxu0 0.0
    %75 = vmatpush1.msra.mxu0 0.0
    %76 = vmatprep.subr.mxu0 0.0
    %77 = vmatpush1.msra.mxu0 0.0
    %78 = vmatprep.subr.mxu0 0.0
    %79 = vmatpush1.msra.mxu0 0.0
    %80 = vmatprep.subr.mxu0 0.0
    %81 = vmatpush1.msra.mxu0 0.0
    %82 = vmatprep.subr.mxu0 0.0
    %83 = vmatpush1.msra.mxu0 0.0
    %84 = vmatprep.subr.mxu0 0.0
    %85 = vmatpush1.msra.mxu0 0.0
    %86 = vmatprep.subr.mxu0 0.0
    %87 = vmatpush1.msra.mxu0 0.0
    %88 = vmatprep.subr.mxu0 0.0
    %89 = vmatpush1.msra.mxu0 0.0
    %90 = vmatprep.subr.mxu0 0.0
    %91 = vmatpush1.msra.mxu0 0.0
    %92 = vmatprep.subr.mxu0 0.0
    %93 = vmatpush1.msra.mxu0 0.0
    %94 = vmatprep.subr.mxu0 0.0
    %95 = vmatpush1.msra.mxu0 0.0
    %96 = vmatprep.subr.mxu0 0.0
    %97 = vmatpush1.msra.mxu0 0.0
    %98 = vmatprep.subr.mxu0 0.0
    %99 = vmatpush1.msra.mxu0 0.0
    %100 = vmatprep.subr.mxu0 0.0
    %101 = vmatpush1.msra.mxu0 0.0
    %102 = vmatprep.subr.mxu0 0.0
    %103 = vmatpush1.msra.mxu0 0.0
    %104 = vmatprep.subr.mxu0 0.0
    %105 = vmatpush1.msra.mxu0 0.0
    %106 = vmatprep.subr.mxu0 0.0
    %107 = vmatpush1.msra.mxu0 0.0
    %108 = vmatprep.subr.mxu0 0.0
    %109 = vmatpush1.msra.mxu0 0.0
    %110 = vmatprep.subr.mxu0 0.0
    %111 = vmatpush1.msra.mxu0 0.0
    %112 = vmatprep.subr.mxu0 0.0
    %113 = vmatpush1.msra.mxu0 0.0
    %114 = vmatprep.mubr.f32.mxu0 0.0
    %115 = vmatmul.mubr.f32.gmra.mrb[0].mxu0 %v48
    %v116 = vpop.f32.mrb[0].mxu0
    %v117 = vadd.f32 0.0, %v116
    %v118 = vpop.f32.mrb[0].mxu0
    %v119 = vadd.f32 0.0, %v118
    %120 = vdwg.mxu0
    %121 = vmatprep.subr.mxu0 %v45
    %122 = vmatpush1.msra.mxu0 %v44
    %123 = vmatprep.subr.mxu0 0.0
    %124 = vmatpush1.msra.mxu0 0.0
    %125 = vmatprep.subr.mxu0 0.0
    %126 = vmatpush1.msra.mxu0 0.0
    %127 = vmatprep.subr.mxu0 0.0
    %128 = vmatpush1.msra.mxu0 0.0
    %129 = vmatprep.subr.mxu0 0.0
    %130 = vmatpush1.msra.mxu0 0.0
    %131 = vmatprep.subr.mxu0 0.0
    %132 = vmatpush1.msra.mxu0 0.0
    %133 = vmatprep.subr.mxu0 0.0
    %134 = vmatpush1.msra.mxu0 0.0
    %135 = vmatprep.subr.mxu0 0.0
    %136 = vmatpush1.msra.mxu0 0.0
    %137 = vmatprep.subr.mxu0 0.0
    %138 = vmatpush1.msra.mxu0 0.0
    %139 = vmatprep.subr.mxu0 0.0
    %140 = vmatpush1.msra.mxu0 0.0
    %141 = vmatprep.subr.mxu0 0.0
    %142 = vmatpush1.msra.mxu0 0.0
    %143 = vmatprep.subr.mxu0 0.0
    %144 = vmatpush1.msra.mxu0 0.0
    %145 = vmatprep.subr.mxu0 0.0
    %146 = vmatpush1.msra.mxu0 0.0
    %147 = vmatprep.subr.mxu0 0.0
    %148 = vmatpush1.msra.mxu0 0.0
    %149 = vmatprep.subr.mxu0 0.0
    %150 = vmatpush1.msra.mxu0 0.0
    %151 = vmatprep.subr.mxu0 0.0
    %152 = vmatpush1.msra.mxu0 0.0
    %153 = vmatprep.subr.mxu0 0.0
    %154 = vmatpush1.msra.mxu0 0.0
    %155 = vmatprep.subr.mxu0 0.0
    %156 = vmatpush1.msra.mxu0 0.0
    %157 = vmatprep.subr.mxu0 0.0
    %158 = vmatpush1.msra.mxu0 0.0
    %159 = vmatprep.subr.mxu0 0.0
    %160 = vmatpush1.msra.mxu0 0.0
    %161 = vmatprep.subr.mxu0 0.0
    %162 = vmatpush1.msra.mxu0 0.0
    %163 = vmatprep.subr.mxu0 0.0
    %164 = vmatpush1.msra.mxu0 0.0
    %165 = vmatprep.subr.mxu0 0.0
    %166 = vmatpush1.msra.mxu0 0.0
    %167 = vmatprep.subr.mxu0 0.0
    %168 = vmatpush1.msra.mxu0 0.0
    %169 = vmatprep.subr.mxu0 0.0
    %170 = vmatpush1.msra.mxu0 0.0
    %171 = vmatprep.subr.mxu0 0.0
    %172 = vmatpush1.msra.mxu0 0.0
    %173 = vmatprep.subr.mxu0 0.0
    %174 = vmatpush1.msra.mxu0 0.0
    %175 = vmatprep.subr.mxu0 0.0
    %176 = vmatpush1.msra.mxu0 0.0
    %177 = vmatprep.subr.mxu0 0.0
    %178 = vmatpush1.msra.mxu0 0.0
    %179 = vmatprep.subr.mxu0 0.0
    %180 = vmatpush1.msra.mxu0 0.0
    %181 = vmatprep.subr.mxu0 0.0
    %182 = vmatpush1.msra.mxu0 0.0
    %183 = vmatprep.subr.mxu0 0.0
    %184 = vmatpush1.msra.mxu0 0.0
    %185 = vmatprep.mubr.f32.mxu0 0.0
    %186 = vmatmul.mubr.f32.gmra.mrb[0].mxu0 %v48
    %v187 = vpop.f32.mrb[0].mxu0
    %v188 = vadd.f32 0.0, %v187
    %v189 = vpop.f32.mrb[0].mxu0
    %v190 = vadd.f32 0.0, %v189
    %191 = vdwg.mxu0
    %vm192 = vcmask 261120
    %v194 = vsel %vm192, %v24, 0
    %196 = vmatprep.subr.mxu0 %v26
    %197 = vmatpush1.msra.mxu0 %v25
    %198 = vmatprep.subr.mxu0 %v30
    %199 = vmatpush1.msra.mxu0 %v29
    %200 = vmatprep.subr.mxu0 %v34
    %201 = vmatpush1.msra.mxu0 %v33
    %202 = vmatprep.subr.mxu0 %v38
    %203 = vmatpush1.msra.mxu0 %v37
    %204 = vmatprep.subr.mxu0 0.0
    %205 = vmatpush1.msra.mxu0 0.0
    %206 = vmatprep.subr.mxu0 0.0
    %207 = vmatpush1.msra.mxu0 0.0
    %208 = vmatprep.subr.mxu0 0.0
    %209 = vmatpush1.msra.mxu0 0.0
    %210 = vmatprep.subr.mxu0 0.0
    %211 = vmatpush1.msra.mxu0 0.0
    %212 = vmatprep.subr.mxu0 0.0
    %213 = vmatpush1.msra.mxu0 0.0
    %214 = vmatprep.subr.mxu0 0.0
    %215 = vmatpush1.msra.mxu0 0.0
    %216 = vmatprep.subr.mxu0 0.0
    %217 = vmatpush1.msra.mxu0 0.0
    %218 = vmatprep.subr.mxu0 0.0
    %219 = vmatpush1.msra.mxu0 0.0
    %220 = vmatprep.subr.mxu0 0.0
    %221 = vmatpush1.msra.mxu0 0.0
    %222 = vmatprep.subr.mxu0 0.0
    %223 = vmatpush1.msra.mxu0 0.0
    %224 = vmatprep.subr.mxu0 0.0
    %225 = vmatpush1.msra.mxu0 0.0
    %226 = vmatprep.subr.mxu0 0.0
    %227 = vmatpush1.msra.mxu0 0.0
    %228 = vmatprep.subr.mxu0 0.0
    %229 = vmatpush1.msra.mxu0 0.0
    %230 = vmatprep.subr.mxu0 0.0
    %231 = vmatpush1.msra.mxu0 0.0
    %232 = vmatprep.subr.mxu0 0.0
    %233 = vmatpush1.msra.mxu0 0.0
    %234 = vmatprep.subr.mxu0 0.0
    %235 = vmatpush1.msra.mxu0 0.0
    %236 = vmatprep.subr.mxu0 0.0
    %237 = vmatpush1.msra.mxu0 0.0
    %238 = vmatprep.subr.mxu0 0.0
    %239 = vmatpush1.msra.mxu0 0.0
    %240 = vmatprep.subr.mxu0 0.0
    %241 = vmatpush1.msra.mxu0 0.0
    %242 = vmatprep.subr.mxu0 0.0
    %243 = vmatpush1.msra.mxu0 0.0
    %244 = vmatprep.subr.mxu0 0.0
    %245 = vmatpush1.msra.mxu0 0.0
    %246 = vmatprep.subr.mxu0 0.0
    %247 = vmatpush1.msra.mxu0 0.0
    %248 = vmatprep.subr.mxu0 0.0
    %249 = vmatpush1.msra.mxu0 0.0
    %250 = vmatprep.subr.mxu0 0.0
    %251 = vmatpush1.msra.mxu0 0.0
    %252 = vmatprep.subr.mxu0 0.0
    %253 = vmatpush1.msra.mxu0 0.0
    %254 = vmatprep.subr.mxu0 0.0
    %255 = vmatpush1.msra.mxu0 0.0
    %256 = vmatprep.subr.mxu0 0.0
    %257 = vmatpush1.msra.mxu0 0.0
    %258 = vmatprep.subr.mxu0 0.0
    %259 = vmatpush1.msra.mxu0 0.0
    %260 = vmatprep.mubr.f32.mxu0 0.0
    %261 = vmatmul.mubr.f32.gmra.mrb[0].mxu0 %v194
    %v262 = vpop.f32.mrb[0].mxu0
    %v263 = vadd.f32 %v117, %v262
    %v264 = vpop.f32.mrb[0].mxu0
    %v265 = vadd.f32 %v119, %v264
    %266 = vdwg.mxu0
    %267 = vmatprep.subr.mxu0 %v28
    %268 = vmatpush1.msra.mxu0 %v27
    %269 = vmatprep.subr.mxu0 %v32
    %270 = vmatpush1.msra.mxu0 %v31
    %271 = vmatprep.subr.mxu0 %v36
    %272 = vmatpush1.msra.mxu0 %v35
    %273 = vmatprep.subr.mxu0 %v40
    %274 = vmatpush1.msra.mxu0 %v39
    %275 = vmatprep.subr.mxu0 0.0
    %276 = vmatpush1.msra.mxu0 0.0
    %277 = vmatprep.subr.mxu0 0.0
    %278 = vmatpush1.msra.mxu0 0.0
    %279 = vmatprep.subr.mxu0 0.0
    %280 = vmatpush1.msra.mxu0 0.0
    %281 = vmatprep.subr.mxu0 0.0
    %282 = vmatpush1.msra.mxu0 0.0
    %283 = vmatprep.subr.mxu0 0.0
    %284 = vmatpush1.msra.mxu0 0.0
    %285 = vmatprep.subr.mxu0 0.0
    %286 = vmatpush1.msra.mxu0 0.0
    %287 = vmatprep.subr.mxu0 0.0
    %288 = vmatpush1.msra.mxu0 0.0
    %289 = vmatprep.subr.mxu0 0.0
    %290 = vmatpush1.msra.mxu0 0.0
    %291 = vmatprep.subr.mxu0 0.0
    %292 = vmatpush1.msra.mxu0 0.0
    %293 = vmatprep.subr.mxu0 0.0
    %294 = vmatpush1.msra.mxu0 0.0
    %295 = vmatprep.subr.mxu0 0.0
    %296 = vmatpush1.msra.mxu0 0.0
    %297 = vmatprep.subr.mxu0 0.0
    %298 = vmatpush1.msra.mxu0 0.0
    %299 = vmatprep.subr.mxu0 0.0
    %300 = vmatpush1.msra.mxu0 0.0
    %301 = vmatprep.subr.mxu0 0.0
    %302 = vmatpush1.msra.mxu0 0.0
    %303 = vmatprep.subr.mxu0 0.0
    %304 = vmatpush1.msra.mxu0 0.0
    %305 = vmatprep.subr.mxu0 0.0
    %306 = vmatpush1.msra.mxu0 0.0
    %307 = vmatprep.subr.mxu0 0.0
    %308 = vmatpush1.msra.mxu0 0.0
    %309 = vmatprep.subr.mxu0 0.0
    %310 = vmatpush1.msra.mxu0 0.0
    %311 = vmatprep.subr.mxu0 0.0
    %312 = vmatpush1.msra.mxu0 0.0
    %313 = vmatprep.subr.mxu0 0.0
    %314 = vmatpush1.msra.mxu0 0.0
    %315 = vmatprep.subr.mxu0 0.0
    %316 = vmatpush1.msra.mxu0 0.0
    %317 = vmatprep.subr.mxu0 0.0
    %318 = vmatpush1.msra.mxu0 0.0
    %319 = vmatprep.subr.mxu0 0.0
    %320 = vmatpush1.msra.mxu0 0.0
    %321 = vmatprep.subr.mxu0 0.0
    %322 = vmatpush1.msra.mxu0 0.0
    %323 = vmatprep.subr.mxu0 0.0
    %324 = vmatpush1.msra.mxu0 0.0
    %325 = vmatprep.subr.mxu0 0.0
    %326 = vmatpush1.msra.mxu0 0.0
    %327 = vmatprep.subr.mxu0 0.0
    %328 = vmatpush1.msra.mxu0 0.0
    %329 = vmatprep.subr.mxu0 0.0
    %330 = vmatpush1.msra.mxu0 0.0
    %331 = vmatprep.mubr.f32.mxu0 0.0
    %332 = vmatmul.mubr.f32.gmra.mrb[0].mxu0 %v194
    %v333 = vpop.f32.mrb[0].mxu0
    %v334 = vadd.f32 %v188, %v333
    %v335 = vpop.f32.mrb[0].mxu0
    %v336 = vadd.f32 %v190, %v335
    %337 = vdwg.mxu0
    %v338 = vld [vmem:[%s3] sm:$0xf]
    %v340 = vlaneseq
    %v341 = vshrl.u32 %v340, 7
    %v342 = vsub.s32 0, %v341
    %v343 = vrot.slane %v338, %v342
    %v344 = vlaneseq
    %v345 = vshrl.u32 %v344, 7
    %v346 = vsub.s32 1, %v345
    %v347 = vrot.slane %v338, %v346
    %v348 = vlaneseq
    %v349 = vshrl.u32 %v348, 7
    %v350 = vsub.s32 2, %v349
    %v351 = vrot.slane %v338, %v350
    %v352 = vlaneseq
    %v353 = vshrl.u32 %v352, 7
    %v354 = vsub.s32 3, %v353
    %v355 = vrot.slane %v338, %v354
    %v360 = vadd.f32 %v263, %v343
    %v361 = vadd.f32 %v265, %v347
    %v362 = vadd.f32 %v334, %v351
    %v363 = vadd.f32 %v336, %v355
    %v364 = vmax.f32 %v360, 0.0
    %v365 = vmax.f32 %v361, 0.0
    %v366 = vmax.f32 %v362, 0.0
    %v367 = vmax.f32 %v363, 0.0
    %v368 = vld [vmem:[%s4] sm:$0xff]
    %v369 = vld [vmem:[%s4 + $0x8] sm:$0xff]
    %v370 = vld [vmem:[%s4 + $0x10] sm:$0xff]
    %v371 = vld [vmem:[%s4 + $0x18] sm:$0xff]
    %v372 = vld [vmem:[%s4 + $0x20] sm:$0xff]
    %v373 = vld [vmem:[%s4 + $0x28] sm:$0xff]
    %v374 = vld [vmem:[%s4 + $0x30] sm:$0xff]
    %v375 = vld [vmem:[%s4 + $0x38] sm:$0xff]
    %v376 = vld [vmem:[%s4 + $0x40] sm:$0xff]
    %v377 = vld [vmem:[%s4 + $0x48] sm:$0xff]
    %v378 = vld [vmem:[%s4 + $0x50] sm:$0xff]
    %v379 = vld [vmem:[%s4 + $0x58] sm:$0xff]
    %v380 = vld [vmem:[%s4 + $0x60] sm:$0xff]
    %v381 = vld [vmem:[%s4 + $0x68] sm:$0xff]
    %v382 = vld [vmem:[%s4 + $0x70] sm:$0xff]
    %v383 = vld [vmem:[%s4 + $0x78] sm:$0xff]
    %v384 = vld [vmem:[%s4 + $0x80] sm:$0xff]
    %v385 = vld [vmem:[%s4 + $0x88] sm:$0xff]
    %v386 = vld [vmem:[%s4 + $0x90] sm:$0xff]
    %v387 = vld [vmem:[%s4 + $0x98] sm:$0xff]
    %v388 = vld [vmem:[%s4 + $0xa0] sm:$0xff]
    %v389 = vld [vmem:[%s4 + $0xa8] sm:$0xff]
    %v390 = vld [vmem:[%s4 + $0xb0] sm:$0xff]
    %v391 = vld [vmem:[%s4 + $0xb8] sm:$0xff]
    %v392 = vld [vmem:[%s4 + $0xc0] sm:$0xff]
    %v393 = vld [vmem:[%s4 + $0xc8] sm:$0xff]
    %v394 = vld [vmem:[%s4 + $0xd0] sm:$0xff]
    %v395 = vld [vmem:[%s4 + $0xd8] sm:$0xff]
    %v396 = vld [vmem:[%s4 + $0xe0] sm:$0xff]
    %v397 = vld [vmem:[%s4 + $0xe8] sm:$0xff]
    %v398 = vld [vmem:[%s4 + $0xf0] sm:$0xff]
    %v399 = vld [vmem:[%s4 + $0xf8] sm:$0xff]
    %v400 = vld [vmem:[%s4 + $0x100] sm:$0xff]
    %v401 = vld [vmem:[%s4 + $0x108] sm:$0xff]
    %v402 = vld [vmem:[%s4 + $0x110] sm:$0xff]
    %v403 = vld [vmem:[%s4 + $0x118] sm:$0xff]
    %v404 = vld [vmem:[%s4 + $0x120] sm:$0xff]
    %v405 = vld [vmem:[%s4 + $0x128] sm:$0xff]
    %v406 = vld [vmem:[%s4 + $0x130] sm:$0xff]
    %v407 = vld [vmem:[%s4 + $0x138] sm:$0xff]
    %v408 = vld [vmem:[%s4 + $0x140] sm:$0xff]
    %v409 = vld [vmem:[%s4 + $0x148] sm:$0xff]
    %v410 = vld [vmem:[%s4 + $0x150] sm:$0xff]
    %v411 = vld [vmem:[%s4 + $0x158] sm:$0xff]
    %v412 = vld [vmem:[%s4 + $0x160] sm:$0xff]
    %v413 = vld [vmem:[%s4 + $0x168] sm:$0xff]
    %v414 = vld [vmem:[%s4 + $0x170] sm:$0xff]
    %v415 = vld [vmem:[%s4 + $0x178] sm:$0xff]
    %v416 = vld [vmem:[%s4 + $0x180] sm:$0xff]
    %v417 = vld [vmem:[%s4 + $0x188] sm:$0xff]
    %v418 = vld [vmem:[%s4 + $0x190] sm:$0xff]
    %v419 = vld [vmem:[%s4 + $0x198] sm:$0xff]
    %v420 = vld [vmem:[%s4 + $0x1a0] sm:$0xff]
    %v421 = vld [vmem:[%s4 + $0x1a8] sm:$0xff]
    %v422 = vld [vmem:[%s4 + $0x1b0] sm:$0xff]
    %v423 = vld [vmem:[%s4 + $0x1b8] sm:$0xff]
    %v424 = vld [vmem:[%s4 + $0x1c0] sm:$0xff]
    %v425 = vld [vmem:[%s4 + $0x1c8] sm:$0xff]
    %v426 = vld [vmem:[%s4 + $0x1d0] sm:$0xff]
    %v427 = vld [vmem:[%s4 + $0x1d8] sm:$0xff]
    %v428 = vld [vmem:[%s4 + $0x1e0] sm:$0xff]
    %v429 = vld [vmem:[%s4 + $0x1e8] sm:$0xff]
    %v430 = vld [vmem:[%s4 + $0x1f0] sm:$0xff]
    %v431 = vld [vmem:[%s4 + $0x1f8] sm:$0xff]
    %v432 = vld [vmem:[%s5] sm:$0x1]
    %v434 = vlaneseq
    %v435 = vshrl.u32 %v434, 7
    %v436 = vsub.s32 0, %v435
    %v437 = vrot.slane %v432, %v436
    %439 = vmatprep.subr.mxu0 0.0
    %440 = vmatpush1.msra.mxu0 %v368
    %441 = vmatprep.subr.mxu0 0.0
    %442 = vmatpush1.msra.mxu0 %v369
    %443 = vmatprep.subr.mxu0 0.0
    %444 = vmatpush1.msra.mxu0 %v370
    %445 = vmatprep.subr.mxu0 0.0
    %446 = vmatpush1.msra.mxu0 %v371
    %447 = vmatprep.subr.mxu0 0.0
    %448 = vmatpush1.msra.mxu0 %v372
    %449 = vmatprep.subr.mxu0 0.0
    %450 = vmatpush1.msra.mxu0 %v373
    %451 = vmatprep.subr.mxu0 0.0
    %452 = vmatpush1.msra.mxu0 %v374
    %453 = vmatprep.subr.mxu0 0.0
    %454 = vmatpush1.msra.mxu0 %v375
    %455 = vmatprep.subr.mxu0 0.0
    %456 = vmatpush1.msra.mxu0 %v376
    %457 = vmatprep.subr.mxu0 0.0
    %458 = vmatpush1.msra.mxu0 %v377
    %459 = vmatprep.subr.mxu0 0.0
    %460 = vmatpush1.msra.mxu0 %v378
    %461 = vmatprep.subr.mxu0 0.0
    %462 = vmatpush1.msra.mxu0 %v379
    %463 = vmatprep.subr.mxu0 0.0
    %464 = vmatpush1.msra.mxu0 %v380
    %465 = vmatprep.subr.mxu0 0.0
    %466 = vmatpush1.msra.mxu0 %v381
    %467 = vmatprep.subr.mxu0 0.0
    %468 = vmatpush1.msra.mxu0 %v382
    %469 = vmatprep.subr.mxu0 0.0
    %470 = vmatpush1.msra.mxu0 %v383
    %471 = vmatprep.subr.mxu0 0.0
    %472 = vmatpush1.msra.mxu0 %v384
    %473 = vmatprep.subr.mxu0 0.0
    %474 = vmatpush1.msra.mxu0 %v385
    %475 = vmatprep.subr.mxu0 0.0
    %476 = vmatpush1.msra.mxu0 %v386
    %477 = vmatprep.subr.mxu0 0.0
    %478 = vmatpush1.msra.mxu0 %v387
    %479 = vmatprep.subr.mxu0 0.0
    %480 = vmatpush1.msra.mxu0 %v388
    %481 = vmatprep.subr.mxu0 0.0
    %482 = vmatpush1.msra.mxu0 %v389
    %483 = vmatprep.subr.mxu0 0.0
    %484 = vmatpush1.msra.mxu0 %v390
    %485 = vmatprep.subr.mxu0 0.0
    %486 = vmatpush1.msra.mxu0 %v391
    %487 = vmatprep.subr.mxu0 0.0
    %488 = vmatpush1.msra.mxu0 %v392
    %489 = vmatprep.subr.mxu0 0.0
    %490 = vmatpush1.msra.mxu0 %v393
    %491 = vmatprep.subr.mxu0 0.0
    %492 = vmatpush1.msra.mxu0 %v394
    %493 = vmatprep.subr.mxu0 0.0
    %494 = vmatpush1.msra.mxu0 %v395
    %495 = vmatprep.subr.mxu0 0.0
    %496 = vmatpush1.msra.mxu0 %v396
    %497 = vmatprep.subr.mxu0 0.0
    %498 = vmatpush1.msra.mxu0 %v397
    %499 = vmatprep.subr.mxu0 0.0
    %500 = vmatpush1.msra.mxu0 %v398
    %501 = vmatprep.subr.mxu0 0.0
    %502 = vmatpush1.msra.mxu0 %v399
    %503 = vmatprep.mubr.f32.mxu0 %v365
    %504 = vmatmul.mubr.f32.gmra.mrb[0].mxu0 %v364
    %v505 = vpop.f32.mrb[0].mxu0
    %v506 = vadd.f32 %v437, %v505
    %v507 = vpop.f32.mrb[0].mxu0
    %508 = vdwg.mxu0
    %509 = vmatprep.subr.mxu0 0.0
    %510 = vmatpush1.msra.mxu0 %v400
    %511 = vmatprep.subr.mxu0 0.0
    %512 = vmatpush1.msra.mxu0 %v401
    %513 = vmatprep.subr.mxu0 0.0
    %514 = vmatpush1.msra.mxu0 %v402
    %515 = vmatprep.subr.mxu0 0.0
    %516 = vmatpush1.msra.mxu0 %v403
    %517 = vmatprep.subr.mxu0 0.0
    %518 = vmatpush1.msra.mxu0 %v404
    %519 = vmatprep.subr.mxu0 0.0
    %520 = vmatpush1.msra.mxu0 %v405
    %521 = vmatprep.subr.mxu0 0.0
    %522 = vmatpush1.msra.mxu0 %v406
    %523 = vmatprep.subr.mxu0 0.0
    %524 = vmatpush1.msra.mxu0 %v407
    %525 = vmatprep.subr.mxu0 0.0
    %526 = vmatpush1.msra.mxu0 %v408
    %527 = vmatprep.subr.mxu0 0.0
    %528 = vmatpush1.msra.mxu0 %v409
    %529 = vmatprep.subr.mxu0 0.0
    %530 = vmatpush1.msra.mxu0 %v410
    %531 = vmatprep.subr.mxu0 0.0
    %532 = vmatpush1.msra.mxu0 %v411
    %533 = vmatprep.subr.mxu0 0.0
    %534 = vmatpush1.msra.mxu0 %v412
    %535 = vmatprep.subr.mxu0 0.0
    %536 = vmatpush1.msra.mxu0 %v413
    %537 = vmatprep.subr.mxu0 0.0
    %538 = vmatpush1.msra.mxu0 %v414
    %539 = vmatprep.subr.mxu0 0.0
    %540 = vmatpush1.msra.mxu0 %v415
    %541 = vmatprep.subr.mxu0 0.0
    %542 = vmatpush1.msra.mxu0 %v416
    %543 = vmatprep.subr.mxu0 0.0
    %544 = vmatpush1.msra.mxu0 %v417
    %545 = vmatprep.subr.mxu0 0.0
    %546 = vmatpush1.msra.mxu0 %v418
    %547 = vmatprep.subr.mxu0 0.0
    %548 = vmatpush1.msra.mxu0 %v419
    %549 = vmatprep.subr.mxu0 0.0
    %550 = vmatpush1.msra.mxu0 %v420
    %551 = vmatprep.subr.mxu0 0.0
    %552 = vmatpush1.msra.mxu0 %v421
    %553 = vmatprep.subr.mxu0 0.0
    %554 = vmatpush1.msra.mxu0 %v422
    %555 = vmatprep.subr.mxu0 0.0
    %556 = vmatpush1.msra.mxu0 %v423
    %557 = vmatprep.subr.mxu0 0.0
    %558 = vmatpush1.msra.mxu0 %v424
    %559 = vmatprep.subr.mxu0 0.0
    %560 = vmatpush1.msra.mxu0 %v425
    %561 = vmatprep.subr.mxu0 0.0
    %562 = vmatpush1.msra.mxu0 %v426
    %563 = vmatprep.subr.mxu0 0.0
    %564 = vmatpush1.msra.mxu0 %v427
    %565 = vmatprep.subr.mxu0 0.0
    %566 = vmatpush1.msra.mxu0 %v428
    %567 = vmatprep.subr.mxu0 0.0
    %568 = vmatpush1.msra.mxu0 %v429
    %569 = vmatprep.subr.mxu0 0.0
    %570 = vmatpush1.msra.mxu0 %v430
    %571 = vmatprep.subr.mxu0 0.0
    %572 = vmatpush1.msra.mxu0 %v431
    %573 = vmatprep.mubr.f32.mxu0 %v367
    %574 = vmatmul.mubr.f32.gmra.mrb[0].mxu0 %v366
    %v575 = vpop.f32.mrb[0].mxu0
    %v576 = vadd.f32 %v506, %v575
    %v577 = vpop.f32.mrb[0].mxu0
    %578 = vdwg.mxu0
    %vm579 = vcmask 254976
    %580 = vst.msk [vmem:[#allocation2] sm:$0x3] %vm579, %v576
    // Predicated region
    $region26: #{forward_dynamics.1} parent=1 // pred_check
      _
    $region27: #{forward_dynamics.1} parent=1 // pred_check_branch
      %582 = sbr.rel (0) target = $region29
    $region28: #{forward_dynamics.1} parent=1 // pred_region
      %s584 = ssub.s32 32, 32
      %585 = vsyncadd [#allocation3], %s584
      %s587 = sshll.u32 [#allocation2], 4
      %s588 = int_to_ptr.vmem [resolvable:$true] %s587
      %590 = dma.vmem_to_hbm [thread:$0]  %s588, 32, %s6, [#allocation3]
    $region29: #{forward_dynamics.1} parent=1 // pred_fallthru
      _
    // Predicated region
    $region30: #{forward_dynamics.1} parent=1 // pred_check
      _
    $region31: #{forward_dynamics.1} parent=1 // pred_check_branch
      %592 = sbr.rel (0) target = $region33
    $region32: #{forward_dynamics.1} parent=1 // pred_region
      %593 = dma.done [#allocation3], 32
    $region33: #{forward_dynamics.1} parent=1 // pred_fallthru
      _
    %594 = vsyncpa [#allocation3], 1

</llo_original>
